<compile_context>
chip_gen: v5e
topology: v5e:2x2
jax: 0.10.0
libtpu: 0.0.40
codegen_flags: <defaults>
</compile_context>

<pallas_src>
import functools
import math

import jax
import jax.numpy as jnp
from jax.experimental import pallas as pl
from jax.experimental.pallas import tpu as pltpu


def _round_up(x, m):
    return ((x + m - 1) // m) * m


def _round_down(x, m):
    return (x // m) * m


def _layernorm_kernel(alpha_ref, bias_ref, x_ref, o_ref, *, eps: float, n: int):
    """Normalize each row of the (row_tile, H) block over the last (lane) axis.

    x_ref/o_ref: (row_tile, H) VMEM blocks (native dtype in HBM; widened to f32
    only in-register).  alpha_ref/bias_ref: (1, 1) SMEM scalars.
    """
    x = x_ref[...].astype(jnp.float32)
    # Mean over the last axis (one XLU reduction pass).
    mean = jnp.sum(x, axis=-1, keepdims=True) * (1.0 / n)
    diff = x - mean
    # torch.std default is unbiased (ddof=1) -> divide by (n - 1).
    # max(n - 1, 1) guards the degenerate H == 1 case (torch would give nan).
    var = jnp.sum(diff * diff, axis=-1, keepdims=True) * (1.0 / max(n - 1, 1))
    std = jnp.sqrt(var)
    # One reciprocal per ROW on the EUP (its own, otherwise-idle VLIW slot) plus a
    # broadcast multiply, instead of a per-ELEMENT divide burning VPU throughput.
    scale = alpha_ref[0, 0] * pl.reciprocal(std + eps, approx=True)
    o_ref[...] = (diff * scale + bias_ref[0, 0]).astype(o_ref.dtype)


def layer_normalization(x, alpha, bias, eps: float = 1e-6, row_tile=None):
    """Pallas TPU implementation of the PyTorch LayerNormalization module."""
    orig_shape = x.shape
    H = int(orig_shape[-1])
    R = int(math.prod(orig_shape[:-1])) if len(orig_shape) > 1 else 1
    x2 = x.reshape(R, H)

    itemsize = jnp.dtype(x.dtype).itemsize
    # Sublane packing multiple: 8 for 4-byte dtypes, 16 for bf16, 32 for 8-bit.
    sub = max(8, 32 // itemsize)

    # Generation-aware VMEM sizing: v5e/v6e have 128 MiB physical VMEM, v7x only
    # 64 MiB.  Use at most half the physical capacity (capped at 64 MiB) and pass
    # it explicitly so large tiles don't trip the small default scoped limit.
    try:
        vmem_phys = int(pltpu.get_tpu_info().vmem_capacity_bytes)
    except Exception:
        vmem_phys = 128 * 1024 * 1024
    vmem_limit = int(min(vmem_phys // 2, 64 * 1024 * 1024))

    if row_tile is None:
        # Per-row footprint: double-buffered native-dtype input + output blocks
        # (2x in + 2x out) plus ~2 row-sized f32 temporaries inside the kernel.
        bytes_per_row = H * (4 * itemsize + 2 * 4)
        budget = vmem_limit // 2  # leave headroom for compiler scratch/spills
        row_tile = _round_down(max(budget // bytes_per_row, sub), sub)
        row_tile = min(row_tile, 4096)               # amortization saturates
        row_tile = min(row_tile, _round_up(R, sub))  # don't exceed the problem
        if R > sub:
            # Keep >= 2 grid steps so both v7x TensorCores get work
            # (no effect on single-core v5e/v6e).
            row_tile = min(row_tile, max(sub, _round_up(-(-R // 2), sub)))
    row_tile = max(sub, _round_down(int(row_tile), sub))

    # Partial last block (R % row_tile != 0) is fine: rows are independent, OOB
    # reads are masked-garbage rows whose writes are dropped.  No host-side pad.
    grid = (pl.cdiv(R, row_tile),)

    alpha2 = jnp.reshape(alpha, (1, 1)).astype(jnp.float32)
    bias2 = jnp.reshape(bias, (1, 1)).astype(jnp.float32)

    kernel = functools.partial(_layernorm_kernel, eps=float(eps), n=H)

    # TODO(synk): for H << 128 the output stores are lane-masked (vst.msk); a
    # lane-dense repack (rows on the lane axis) would recover ~4x store bandwidth.
    out = pl.pallas_call(
        kernel,
        out_shape=jax.ShapeDtypeStruct((R, H), x.dtype),
        grid=grid,
        in_specs=[
            pl.BlockSpec(memory_space=pltpu.MemorySpace.SMEM),  # alpha (1,1)
            pl.BlockSpec(memory_space=pltpu.MemorySpace.SMEM),  # bias  (1,1)
            pl.BlockSpec((row_tile, H), lambda i: (i, 0)),
        ],
        out_specs=pl.BlockSpec((row_tile, H), lambda i: (i, 0)),
        compiler_params=pltpu.CompilerParams(
            dimension_semantics=("parallel",),
            vmem_limit_bytes=vmem_limit,
        ),
    )(alpha2, bias2, x2)

    return out.reshape(orig_shape)


if __name__ == "__main__":
    # Module __init__: alpha = ones(1), bias = ones(1), eps = 1e-6
    alpha = jnp.ones((1,), dtype=jnp.float32)
    bias = jnp.ones((1,), dtype=jnp.float32)
    eps = 1e-6

    key = jax.random.PRNGKey(0)
    k1, k2 = jax.random.split(key)

    def ref(x):
        mean = jnp.mean(x, axis=-1, keepdims=True)
        std = jnp.std(x, axis=-1, keepdims=True, ddof=1)  # unbiased, like torch.std
        return alpha[0] * (x - mean) / (std + eps) + bias[0]

    # Case 1: the module-implied small shape (batch=2, seq=8, hidden=32).
    x1 = jax.random.normal(k1, (2, 8, 32), dtype=jnp.float32)
    y1 = jax.block_until_ready(layer_normalization(x1, alpha, bias, eps=eps))
    # Tolerance accommodates the approximate EUP reciprocal (~1e-4 rel error).
    assert jnp.allclose(y1, ref(x1), atol=5e-3, rtol=5e-3), "mismatch (2,8,32)"

    # Case 2: lane-dense hidden (multiple of 128) to exercise the main layout.
    x2 = jax.random.normal(k2, (4, 16, 128), dtype=jnp.float32)
    y2 = jax.block_until_ready(layer_normalization(x2, alpha, bias, eps=eps))
    assert jnp.allclose(y2, ref(x2), atol=5e-3, rtol=5e-3), "mismatch (4,16,128)"

    print("KERNEL_OK")
</pallas_src>

<mosaic_0001>
module attributes {stable_mosaic.version = 11 : i64} {
  func.func @_layernorm_kernel(%arg0: i32, %arg1: memref<1x1xf32, #tpu.memory_space<smem>>, %arg2: memref<1x1xf32, #tpu.memory_space<smem>>, %arg3: memref<8x32xf32, #tpu.memory_space<vmem>>, %arg4: memref<8x32xf32, #tpu.memory_space<vmem>>) attributes {dimension_semantics = [#tpu.dimension_semantics<parallel>], iteration_bounds = array<i64: 2>, scalar_prefetch = 0 : i64, scratch_operands = 0 : i64, tpu.core_type = #tpu.core_type<tc>, window_params = [{transform_indices = @transform_0, window_bounds = array<i64: 1, 1>}, {transform_indices = @transform_1, window_bounds = array<i64: 1, 1>}, {transform_indices = @transform_2, window_bounds = array<i64: 8, 32>}, {transform_indices = @transform_3, window_bounds = array<i64: 8, 32>}]} {
    %c0 = arith.constant 0 : index
    %c0_0 = arith.constant 0 : index
    %0 = vector.load %arg3[%c0, %c0_0] : memref<8x32xf32, #tpu.memory_space<vmem>>, vector<8x32xf32>
    %cst = arith.constant dense<0.000000e+00> : vector<8xf32>
    %1 = vector.multi_reduction <add>, %0, %cst [1] : vector<8x32xf32> to vector<8xf32>
    %2 = vector.shape_cast %1 : vector<8xf32> to vector<8x1xf32>
    %cst_1 = arith.constant 3.125000e-02 : f32
    %3 = vector.broadcast %cst_1 : f32 to vector<8x1xf32>
    %4 = arith.mulf %2, %3 : vector<8x1xf32>
    %5 = vector.broadcast %4 : vector<8x1xf32> to vector<8x32xf32>
    %6 = arith.subf %0, %5 : vector<8x32xf32>
    %7 = arith.mulf %6, %6 : vector<8x32xf32>
    %cst_2 = arith.constant dense<0.000000e+00> : vector<8xf32>
    %8 = vector.multi_reduction <add>, %7, %cst_2 [1] : vector<8x32xf32> to vector<8xf32>
    %9 = vector.shape_cast %8 : vector<8xf32> to vector<8x1xf32>
    %cst_3 = arith.constant 0.0322580636 : f32
    %10 = vector.broadcast %cst_3 : f32 to vector<8x1xf32>
    %11 = arith.mulf %9, %10 : vector<8x1xf32>
    %12 = math.sqrt %11 : vector<8x1xf32>
    %c0_4 = arith.constant 0 : index
    %c0_5 = arith.constant 0 : index
    %13 = memref.load %arg1[%c0_4, %c0_5] : memref<1x1xf32, #tpu.memory_space<smem>>
    %cst_6 = arith.constant 9.99999997E-7 : f32
    %14 = vector.broadcast %cst_6 : f32 to vector<8x1xf32>
    %15 = arith.addf %12, %14 : vector<8x1xf32>
    %16 = tpu.reciprocal %15 {approx = true} : vector<8x1xf32> -> vector<8x1xf32>
    %17 = vector.broadcast %13 : f32 to vector<8x1xf32>
    %18 = arith.mulf %17, %16 : vector<8x1xf32>
    %19 = vector.broadcast %18 : vector<8x1xf32> to vector<8x32xf32>
    %20 = arith.mulf %6, %19 : vector<8x32xf32>
    %c0_7 = arith.constant 0 : index
    %c0_8 = arith.constant 0 : index
    %21 = memref.load %arg2[%c0_7, %c0_8] : memref<1x1xf32, #tpu.memory_space<smem>>
    %22 = vector.broadcast %21 : f32 to vector<8x32xf32>
    %23 = arith.addf %20, %22 : vector<8x32xf32>
    %c0_9 = arith.constant 0 : index
    %c0_10 = arith.constant 0 : index
    %24 = vector.load %arg4[%c0_9, %c0_10] : memref<8x32xf32, #tpu.memory_space<vmem>>, vector<8x32xf32>
    tpu.vector_store %arg4[%c0_9, %c0_10], %23 {strides = array<i32>} : memref<8x32xf32, #tpu.memory_space<vmem>>, vector<8x32xf32>,
    return
  }
  func.func @transform_0(%arg0: i32) -> (i32, i32) {
    %c0_i32 = arith.constant 0 : i32
    %c0_i32_0 = arith.constant 0 : i32
    %c0_i32_1 = arith.constant 0 : i32
    return %c0_i32, %c0_i32_0 : i32, i32
  }
  func.func @transform_1(%arg0: i32) -> (i32, i32) {
    %c0_i32 = arith.constant 0 : i32
    %c0_i32_0 = arith.constant 0 : i32
    %c0_i32_1 = arith.constant 0 : i32
    return %c0_i32, %c0_i32_0 : i32, i32
  }
  func.func @transform_2(%arg0: i32) -> (i32, i32) {
    %c0_i32 = arith.constant 0 : i32
    %c0_i32_0 = arith.constant 0 : i32
    return %arg0, %c0_i32 : i32, i32
  }
  func.func @transform_3(%arg0: i32) -> (i32, i32) {
    %c0_i32 = arith.constant 0 : i32
    %c0_i32_0 = arith.constant 0 : i32
    return %arg0, %c0_i32 : i32, i32
  }
}

</mosaic_0001>

<llo_original>
// kernel: tpu_custom_call.1
$region0: #{tpu_custom_call.1}
  #allocation0 [shape = 'u32[]', space=smem, size = 0x4, offset = 0x4, fixed_abs, tag = 'smem constant byte address 0x4 - core index']
  #allocation1 [shape = 'u32[72,128]{1,0:T(1,128)}', space=vmem, size = 0x9000, scoped, tag = 'internal scratch']
  #allocation2 [shape = 'f32[1,1]{1,0:T(1,128)S(6)}', space=smem, size = 0x200, scoped, tag = 'scoped memory for tpu_custom_call.1']
  #allocation3 [shape = 'f32[1,1]{1,0:T(1,128)S(6)}', space=smem, size = 0x200, scoped, tag = 'scoped memory for tpu_custom_call.1']
  %s0 = inlined_call_operand.<no memory space> [shape: f32[1,1], index: 0, kind: input, shape index: {}]
  %s1 = inlined_call_operand.<no memory space> [shape: f32[1,1], index: 1, kind: input, shape index: {}]
  %s2 = inlined_call_operand.hbm [shape: f32[16,32], index: 2, kind: input, shape index: {}]
  %s3 = inlined_call_operand.hbm [shape: f32[16,32], index: 3, kind: output, shape index: {}]
  %s4 = sld [smem:[#allocation0]]
  $region49: #{tpu_custom_call.1} parent=0
    _
  %s6 = ssub.s32 1, %s4
  %s7 = scalar_select 0, %s6, %s4
  %8 = sst [smem:[#allocation2]] %s0
  %9 = sst [smem:[#allocation3]] %s1
  $region1: #{tpu_custom_call.1} parent=0
    #allocation4 [shape = 'u8[8192]{0}', space=vmem, size = 0x2000, scoped, tag = 'input window, operand 2']
    #allocation5 [shape = 's32[2]{0}', space=sflag, size = 0x8, scoped, tag = 'scoped memory for tpu_custom_call.1']
    #allocation6 [shape = 's32[2]{0}', space=sflag, size = 0x8, scoped, tag = 'scoped memory for tpu_custom_call.1']
    #allocation7 [shape = 'u8[8192]{0}', space=vmem, size = 0x2000, scoped, tag = 'output window, operand 0']
    %10 = vsyncpa [#allocation5], 0
    %s11 = scalar_lea.sflag [#allocation5], 1
    %12 = vsyncpa %s11, 0
    %13 = vsyncpa [#allocation6], 0
    %s14 = scalar_lea.sflag [#allocation6], 1
    %15 = vsyncpa %s14, 0
    loop: start=0, step=1, limit=4
    $region2: #{tpu_custom_call.1} parent=1 // loop_pre_header
      _
    $region3: #{tpu_custom_call.1} parent=1 // loop_header
      %s17 = sphi 0, %s21
      %p18 = scmp.ge.s32.totalorder %s17, 4
      %s25 = sphi 0, %s25
      %s27 = sphi 0, %s25
      %s28 = sphi 0, %s27
      %s42 = sphi 0, %s28
      %s46 = sphi 0, %s46
      %s48 = sphi 0, %s46
      %s49 = sphi 0, %s48
      %s63 = sphi 0, %s49
      %s69 = sphi 0, %s71
      %s72 = sphi 0, %s69
      %s73 = sphi 0, %s72
      %s89 = sphi 0, %s73
      %s95 = sphi 0, %s97
      %s98 = sphi 0, %s95
      %s99 = sphi 0, %s98
      %s115 = sphi 0, %s99
    $region4: #{tpu_custom_call.1} parent=1 // loop_header_branch
      %20 = sbr.rel (%p18) target = $region8
    $region5: #{tpu_custom_call.1} parent=1 // loop_body
      %s22 = ssub.s32 %s17, 1
      %s23 = ssub.s32 %s17, 2
      %s24 = sadd.s32 %s17, 1
      %s26 = sadd.s32 %s25, 1
      %p29 = scmp.eq.s32.totalorder %s17, 1
      %p30 = scmp.ne.s32.totalorder %s25, %s27
      %p31 = scmp.eq.s32.totalorder %s17, 0
      %p32 = por %p30, %p31
      %p33 = scmp.ne.s32.totalorder %s25, %s27
      %p34 = scmp.eq.s32.totalorder %s22, 1
      %p35 = por %p33, %p34
      %p36 = scmp.ne.s32.totalorder %s27, %s28
      %p37 = scmp.eq.s32.totalorder %s22, 0
      %p38 = por %p36, %p37
      %p39 = scmp.ne.s32.totalorder %s27, %s28
      %p40 = scmp.eq.s32.totalorder %s23, 1
      %p41 = por %p39, %p40
      %p43 = scmp.ne.s32.totalorder %s28, %s42
      %p44 = scmp.eq.s32.totalorder %s23, 0
      %p45 = por %p43, %p44
      %s47 = sadd.s32 %s46, 1
      %p50 = scmp.eq.s32.totalorder %s17, 1
      %p51 = scmp.ne.s32.totalorder %s46, %s48
      %p52 = scmp.eq.s32.totalorder %s17, 0
      %p53 = por %p51, %p52
      %p54 = scmp.ne.s32.totalorder %s46, %s48
      %p55 = scmp.eq.s32.totalorder %s22, 1
      %p56 = por %p54, %p55
      %p57 = scmp.ne.s32.totalorder %s48, %s49
      %p58 = scmp.eq.s32.totalorder %s22, 0
      %p59 = por %p57, %p58
      %p60 = scmp.ne.s32.totalorder %s48, %s49
      %p61 = scmp.eq.s32.totalorder %s23, 1
      %p62 = por %p60, %p61
      %p64 = scmp.ne.s32.totalorder %s49, %s63
      %p65 = scmp.eq.s32.totalorder %s23, 0
      %p66 = por %p64, %p65
      %s67 = ssub.s32 %s17, %s24
      %p68 = scmp.eq.s32.totalorder %s67, 0
      %s70 = sadd.s32 %s69, 1
      %s71 = scalar_select %p68, %s69, %s70
      %p74 = pneg %p68
      %p75 = scmp.eq.s32.totalorder %s17, 1
      %p76 = por %p74, %p75
      %p77 = scmp.ne.s32.totalorder %s69, %s72
      %p78 = scmp.eq.s32.totalorder %s17, 0
      %p79 = por %p77, %p78
      %p80 = scmp.ne.s32.totalorder %s69, %s72
      %p81 = scmp.eq.s32.totalorder %s22, 1
      %p82 = por %p80, %p81
      %p83 = scmp.ne.s32.totalorder %s72, %s73
      %p84 = scmp.eq.s32.totalorder %s22, 0
      %p85 = por %p83, %p84
      %p86 = scmp.ne.s32.totalorder %s72, %s73
      %p87 = scmp.eq.s32.totalorder %s23, 1
      %p88 = por %p86, %p87
      %p90 = scmp.ne.s32.totalorder %s73, %s89
      %p91 = scmp.eq.s32.totalorder %s23, 0
      %p92 = por %p90, %p91
      %s93 = ssub.s32 %s17, %s24
      %p94 = scmp.eq.s32.totalorder %s93, 0
      %s96 = sadd.s32 %s95, 1
      %s97 = scalar_select %p94, %s95, %s96
      %p100 = pneg %p94
      %p101 = scmp.eq.s32.totalorder %s17, 1
      %p102 = por %p100, %p101
      %p103 = scmp.ne.s32.totalorder %s95, %s98
      %p104 = scmp.eq.s32.totalorder %s17, 0
      %p105 = por %p103, %p104
      %p106 = scmp.ne.s32.totalorder %s95, %s98
      %p107 = scmp.eq.s32.totalorder %s22, 1
      %p108 = por %p106, %p107
      %p109 = scmp.ne.s32.totalorder %s98, %s99
      %p110 = scmp.eq.s32.totalorder %s22, 0
      %p111 = por %p109, %p110
      %p112 = scmp.ne.s32.totalorder %s98, %s99
      %p113 = scmp.eq.s32.totalorder %s23, 1
      %p114 = por %p112, %p113
      %p116 = scmp.ne.s32.totalorder %s99, %s115
      %p117 = scmp.eq.s32.totalorder %s23, 0
      %p118 = por %p116, %p117
      %p119 = scmp.le.s32.totalorder 1, %s17
      %p120 = scmp.lt.s32.totalorder %s17, 3
      %p121 = pnand %p119, %p120
      %p122 = pneg %p121
      // Predicated region
      $region9: #{tpu_custom_call.1} parent=5 // pred_check
        _
      $region10: #{tpu_custom_call.1} parent=5 // pred_check_branch
        %124 = sbr.rel (%p121) target = $region12
      $region11: #{tpu_custom_call.1} parent=5 // pred_region
        %s125 = ssub.s32 %s17, 1
        // Predicated region
        $region13: #{tpu_custom_call.1} parent=11 // pred_check
          %p126 = pneg %p38
        $region14: #{tpu_custom_call.1} parent=11 // pred_check_branch
          %128 = sbr.rel (%p126) target = $region16
        $region15: #{tpu_custom_call.1} parent=11 // pred_region
          _
        $region16: #{tpu_custom_call.1} parent=11 // pred_fallthru
          _
        // Predicated region
        $region17: #{tpu_custom_call.1} parent=11 // pred_check
          %p129 = pneg %p59
        $region18: #{tpu_custom_call.1} parent=11 // pred_check_branch
          %131 = sbr.rel (%p129) target = $region20
        $region19: #{tpu_custom_call.1} parent=11 // pred_region
          _
        $region20: #{tpu_custom_call.1} parent=11 // pred_fallthru
          _
      $region12: #{tpu_custom_call.1} parent=5 // pred_fallthru
        _
      %p132 = scmp.lt.s32.totalorder %s17, 2
      // Predicated region
      $region21: #{tpu_custom_call.1} parent=5 // pred_check
        %p133 = pneg %p132
      $region22: #{tpu_custom_call.1} parent=5 // pred_check_branch
        %135 = sbr.rel (%p133) target = $region24
      $region23: #{tpu_custom_call.1} parent=5 // pred_region
        // Predicated region
        $region25: #{tpu_custom_call.1} parent=23 // pred_check
          %p136 = pneg %p79
        $region26: #{tpu_custom_call.1} parent=23 // pred_check_branch
          %138 = sbr.rel (%p136) target = $region28
        $region27: #{tpu_custom_call.1} parent=23 // pred_region
          %s139 = sand.u32 %s69, 1
          %s140 = scalar_lea.sflag [#allocation5], %s139
          %s141 = sand.u32 %s69, 1
          %s142 = smul.addr %s141, 8
          %s143 = scalar_lea.vmem [#allocation4], %s142
          %145 = vsyncadd %s140, 0
          %s146 = smul.addr %s17, 8
          %s147 = scalar_lea.hbm %s2, %s146
          %s149 = sshll.u32 %s147, 4
          %s150 = int_to_ptr.hbm [resolvable:$true] %s149
          %s151 = sshll.u32 %s143, 4
          %s152 = int_to_ptr.vmem [resolvable:$true] %s151
          %154 = dma.hbm_to_vmem [thread:$0]  %s150, 128, %s152, %s140
        $region28: #{tpu_custom_call.1} parent=23 // pred_fallthru
          _
      $region24: #{tpu_custom_call.1} parent=5 // pred_fallthru
        _
      %p155 = scmp.le.s32.totalorder 1, %s17
      %p156 = scmp.lt.s32.totalorder %s17, 3
      %p157 = pnand %p155, %p156
      %p158 = pneg %p157
      // Predicated region
      $region29: #{tpu_custom_call.1} parent=5 // pred_check
        _
      $region30: #{tpu_custom_call.1} parent=5 // pred_check_branch
        %160 = sbr.rel (%p157) target = $region32
      $region31: #{tpu_custom_call.1} parent=5 // pred_region
        %s161 = ssub.s32 %s17, 1
        %s162 = sand.u32 %s72, 1
        %s163 = scalar_lea.sflag [#allocation5], %s162
        %s164 = sand.u32 %s72, 1
        %s165 = smul.addr %s164, 8
        %s166 = scalar_lea.vmem [#allocation4], %s165
        // Predicated region
        $region33: #{tpu_custom_call.1} parent=31 // pred_check
          %p167 = pneg %p85
        $region34: #{tpu_custom_call.1} parent=31 // pred_check_branch
          %169 = sbr.rel (%p167) target = $region36
        $region35: #{tpu_custom_call.1} parent=31 // pred_region
          %171 = dma.done %s163, 128
        $region36: #{tpu_custom_call.1} parent=31 // pred_fallthru
          _
        %p172 = pneg %p38
        %p173 = pneg %p35
        %p174 = pneg %p59
        %p175 = pneg %p56
        %s176 = sand.u32 %s72, 1
        %s177 = scalar_lea.sflag [#allocation5], %s176
        %s178 = sand.u32 %s72, 1
        %s179 = smul.addr %s178, 8
        %s180 = scalar_lea.vmem [#allocation4], %s179
        %p181 = pneg %p85
        %p182 = pneg %p82
        %p183 = pneg %p111
        %p184 = pneg %p108
        %s185 = sand.u32 %s98, 1
        %s186 = scalar_lea.sflag [#allocation6], %s185
        %s187 = sand.u32 %s98, 1
        %s188 = smul.addr %s187, 8
        %s189 = scalar_lea.vmem [#allocation7], %s188
        %v190 = vld [vmem:[%s166] sm:$0xff]
        %vm191 = vcmask 261120
        %v192 = vsel %vm191, %v190, 0.0
        %193 = vadd.xlane.f32.xlu0 %v192
        %v194 = vpop.xlane.xlu0 %193
        %v195 = vmul.f32 %v194, 0.03125
        %v196 = vsub.f32 %v190, %v195
        %v197 = vmul.f32 %v196, %v196
        %v198 = vsel %vm191, %v197, 0.0
        %199 = vadd.xlane.f32.xlu0 %v198
        %v200 = vpop.xlane.xlu0 %199
        %v201 = vmul.f32 %v200, 0.032258064
        %v202 = vrsqrt.pop %v201
        %v203 = vmul.f32 %v202, %v201
        %v204 = vmul.f32 %v203, %v202
        %v205 = vmul.f32 0.5, %v204
        %v206 = vsub.f32 1.5, %v205
        %v207 = vmul.f32 %v202, %v206
        %v208 = vmul.f32 %v201, %v207
        %vm209 = vcmp.eq.f32.partialorder %v201, inf
        %v210 = vsel %vm209, %v201, %v208
        %vm211 = vcmp.eq.f32.partialorder %v201, 0.0
        %v212 = vand.u32 %v201, 2147483648
        %v213 = vsel %vm211, %v212, %v210
        %s214 = sld [smem:[#allocation2]]
        %v215 = vadd.f32 %v213, 1e-06
        %v216 = vrcp.pop %v215
        %v217 = vstv %s214
        %v218 = vmul.f32 %v217, %v216
        %v219 = vmul.f32 %v196, %v218
        %s220 = sld [smem:[#allocation3]]
        %v221 = vstv %s220
        %v222 = vadd.f32 %v219, %v221
        %223 = vst.msk [vmem:[%s189] sm:$0xff] %vm191, %v222
        %s224 = sand.u32 %s98, 1
        %s225 = scalar_lea.sflag [#allocation6], %s224
        %s226 = sand.u32 %s98, 1
        %s227 = smul.addr %s226, 8
        %s228 = scalar_lea.vmem [#allocation7], %s227
        // Predicated region
        $region37: #{tpu_custom_call.1} parent=31 // pred_check
          %p229 = pneg %p108
        $region38: #{tpu_custom_call.1} parent=31 // pred_check_branch
          %231 = sbr.rel (%p229) target = $region40
        $region39: #{tpu_custom_call.1} parent=31 // pred_region
          %233 = vsyncadd %s225, 0
          %s234 = smul.addr %s22, 8
          %s235 = scalar_lea.hbm %s3, %s234
          %s237 = sshll.u32 %s228, 4
          %s238 = int_to_ptr.vmem [resolvable:$true] %s237
          %s239 = sshll.u32 %s235, 4
          %s240 = int_to_ptr.hbm [resolvable:$true] %s239
          %242 = dma.vmem_to_hbm [thread:$0]  %s238, 128, %s240, %s225
        $region40: #{tpu_custom_call.1} parent=31 // pred_fallthru
          _
      $region32: #{tpu_custom_call.1} parent=5 // pred_fallthru
        _
      %p243 = scmp.le.s32.totalorder 2, %s17
      // Predicated region
      $region41: #{tpu_custom_call.1} parent=5 // pred_check
        %p244 = pneg %p243
      $region42: #{tpu_custom_call.1} parent=5 // pred_check_branch
        %246 = sbr.rel (%p244) target = $region44
      $region43: #{tpu_custom_call.1} parent=5 // pred_region
        %s247 = ssub.s32 %s17, 2
        // Predicated region
        $region45: #{tpu_custom_call.1} parent=43 // pred_check
          %p248 = pneg %p114
        $region46: #{tpu_custom_call.1} parent=43 // pred_check_branch
          %250 = sbr.rel (%p248) target = $region48
        $region47: #{tpu_custom_call.1} parent=43 // pred_region
          %s251 = sand.u32 %s99, 1
          %s252 = scalar_lea.sflag [#allocation6], %s251
          %s253 = sand.u32 %s99, 1
          %s254 = smul.addr %s253, 8
          %s255 = scalar_lea.vmem [#allocation7], %s254
          %257 = dma.done %s252, 128
        $region48: #{tpu_custom_call.1} parent=43 // pred_fallthru
          _
      $region44: #{tpu_custom_call.1} parent=5 // pred_fallthru
        _
    $region6: #{tpu_custom_call.1} parent=1 // loop_footer
      %s21 = sadd.s32 1, %s17
    $region7: #{tpu_custom_call.1} parent=1 // loop_footer_branch
      %16 = sbr.rel target = $region3
    $region8: #{tpu_custom_call.1} parent=1 // loop_exit
      _
    %258 = vsyncpa [#allocation5], 1
    %s259 = scalar_lea.sflag [#allocation5], 1
    %260 = vsyncpa %s259, 1
    %261 = vsyncpa [#allocation6], 1
    %s262 = scalar_lea.sflag [#allocation6], 1
    %263 = vsyncpa %s262, 1

</llo_original>
